<compile_context>
chip_gen: v7x
topology: tpu7x:2x2x1
jax: 0.10.0
libtpu: 0.0.40
codegen_flags: <defaults>
</compile_context>

<pallas_src>
import functools

import jax
import jax.numpy as jnp
from jax.experimental import pallas as pl
from jax.experimental.pallas import tpu as pltpu


def _ce_focal_partial_kernel(logits_ref, targets_ref, wt_ref, out_ref, *,
                             gamma, n_total, tile_rows, use_mxu_rowsum):
    i = pl.program_id(0)

    logits = logits_ref[...].astype(jnp.float32)      # (TN, C)  cast in-register
    targets = targets_ref[...]                        # (TN, 1)  i32
    w_t = wt_ref[...]                                 # (TN, 1)  f32 = class_weights[target]
    TN, C = logits.shape

    # Row-validity mask for the ragged last tile (row-level only; no full-tile pre-mask).
    row_ids = jax.lax.broadcasted_iota(jnp.int32, (TN, 1), 0) + i * tile_rows
    valid = row_ids < n_total                         # (TN, 1) bool

    # Target-class mask (no f32 one-hot materialization).
    class_ids = jax.lax.broadcasted_iota(jnp.int32, (TN, C), 1)
    mask = class_ids == targets                       # (TN, C) bool

    # Numerically-stable softmax pieces.
    m = jnp.max(logits, axis=1, keepdims=True)        # (TN, 1)  XLU row-max
    exp_shifted = jnp.exp(logits - m)                 # (TN, C)  EUP
    masked_logits = jnp.where(mask, logits, 0.0)      # (TN, C)  VALU select

    if use_mxu_rowsum:
        # Row sums on the otherwise-idle MXU; results lane-replicated across 128 lanes,
        # so no (TN,1)->lanes broadcasts are needed downstream.
        ones = jnp.ones((C, 128), jnp.float32)
        sumexp = jnp.dot(exp_shifted, ones, preferred_element_type=jnp.float32)     # (TN,128)
        logit_t = jnp.dot(masked_logits, ones, preferred_element_type=jnp.float32)  # (TN,128)
        lane_div = 128.0
    else:
        sumexp = jnp.sum(exp_shifted, axis=1, keepdims=True)       # (TN, 1)  XLU
        logit_t = jnp.sum(masked_logits, axis=1, keepdims=True)    # (TN, 1)  XLU
        lane_div = 1.0

    lse = jnp.log(sumexp) + m                         # log-sum-exp per row
    nll = lse - logit_t                               # -log softmax[target]
    pt = jnp.exp(logit_t - lse)                       # softmax prob of target

    one_m_pt = 1.0 - pt
    if float(gamma) == 2.0:
        focal_factor = one_m_pt * one_m_pt            # VALU multiply, not EUP pow
    elif float(gamma) == float(int(gamma)):
        focal_factor = one_m_pt ** int(gamma)         # unrolls to multiplies
    else:
        focal_factor = one_m_pt ** gamma
    # Keep the eps form to bit-match the PyTorch module (log(pt + 1e-8)).
    focal = w_t * focal_factor * jnp.log(pt + 1e-8)
    wnll = w_t * nll

    # Row-level SELECTS (not multiplies) so padded-row NaN/Inf from stale VMEM can't leak.
    s_wnll = jnp.sum(jnp.where(valid, wnll, 0.0)) / lane_div
    s_w = jnp.sum(jnp.where(valid, w_t, 0.0))
    s_focal = jnp.sum(jnp.where(valid, focal, 0.0)) / lane_div

    # Lane-dense per-tile partials: lane 0 -> sum(w*nll), lane 1 -> sum(w), lane 2 -> sum(focal).
    lane = jax.lax.broadcasted_iota(jnp.int32, out_ref.shape, 2)
    out_ref[...] = jnp.where(lane == 0, s_wnll,
                   jnp.where(lane == 1, s_w,
                   jnp.where(lane == 2, s_focal, 0.0)))


def _choose_tile_rows(N, C, logits_dtype, vmem_budget_bytes=24 << 20):
    """Tile rows from the in-kernel working set; aligned to the packed-sublane tile."""
    itemsize = jnp.dtype(logits_dtype).itemsize
    if itemsize >= 4:
        row_align = 8                 # f32 min tile (8, 128)
    elif itemsize == 2:
        row_align = 16                # bf16 packed-sublane min tile (16, 128)
    else:
        row_align = 32                # int8 / fp8 min tile (32, 128)

    # Per-row VMEM footprint:
    #   logits input block, double-buffered, native dtype .......... 2 * C * itemsize
    #   ~4 live f32 (TN, C) temporaries (cast/exp/mask/select) ...... 4 * C * 4
    #   narrow (TN,1) targets(i32) + w_t(f32) pad to 128 lanes, x2 .. 2 * 2 * 128 * 4
    #   ~6 live lane-padded (TN, 128) f32 row vectors ................ 6 * 128 * 4
    per_row = 2 * C * itemsize + 4 * C * 4 + 2 * 2 * 128 * 4 + 6 * 128 * 4
    rows = max(row_align, vmem_budget_bytes // per_row)
    rows = (rows // row_align) * row_align

    # Keep at least 2 grid steps so the "parallel" axis can feed both v7x TensorCores
    # and the input pipeline has something to overlap.
    if N > row_align:
        half = ((pl.cdiv(N, 2) + row_align - 1) // row_align) * row_align
        rows = min(rows, half)

    n_pad = ((N + row_align - 1) // row_align) * row_align
    return max(row_align, min(rows, n_pad))


def cross_entropy_focal_loss(logits, targets, class_weights,
                             alpha_ce=1.0, alpha_focal=1.0, gamma=2.0,
                             tile_rows=None, use_mxu_rowsum=True):
    N, C = logits.shape
    targets = targets.astype(jnp.int32)
    targets2d = targets.reshape(N, 1)
    # Hoisted per-sample class weight: trivial N-element gather, fuses into XLA.
    wt2d = class_weights.astype(jnp.float32)[targets].reshape(N, 1)

    if tile_rows is None:
        tile_rows = _choose_tile_rows(N, C, logits.dtype)
    num_tiles = pl.cdiv(N, tile_rows)

    kernel = functools.partial(
        _ce_focal_partial_kernel,
        gamma=float(gamma), n_total=N, tile_rows=tile_rows,
        use_mxu_rowsum=use_mxu_rowsum)

    # TODO(synk): for LLM-scale C where one (tile_rows, C) tile can't fit VMEM, a second
    # grid axis over C with an online log-sum-exp would be needed; not required here.
    partials = pl.pallas_call(
        kernel,
        out_shape=jax.ShapeDtypeStruct((num_tiles, 8, 128), jnp.float32),
        grid=(num_tiles,),
        in_specs=[
            pl.BlockSpec((tile_rows, C), lambda i: (i, 0)),   # logits: native-dtype tiles
            pl.BlockSpec((tile_rows, 1), lambda i: (i, 0)),   # targets (i32)
            pl.BlockSpec((tile_rows, 1), lambda i: (i, 0)),   # per-sample weights (f32)
        ],
        out_specs=pl.BlockSpec((1, 8, 128), lambda i: (i, 0, 0)),
        compiler_params=pltpu.CompilerParams(
            dimension_semantics=("parallel",),                # megacore-shardable on v7x
            vmem_limit_bytes=48 * 1024 * 1024),
    )(logits, targets2d, wt2d)

    # Tiny final reduction in plain JAX (global normalizers, not per-tile).
    s_wnll = jnp.sum(partials[:, 0, 0])
    s_w = jnp.sum(partials[:, 0, 1])
    s_focal = jnp.sum(partials[:, 0, 2])

    loss_ce = s_wnll / s_w
    loss_focal = -s_focal / jnp.float32(N)
    return alpha_ce * loss_ce + alpha_focal * loss_focal


def _reference(logits, targets, class_weights, alpha_ce=1.0, alpha_focal=1.0, gamma=2.0):
    # pure-JAX reference matching the PyTorch module
    N, C = logits.shape
    logits = logits.astype(jnp.float32)
    logp = jax.nn.log_softmax(logits, axis=1)
    w_t = class_weights.astype(jnp.float32)[targets]
    nll = -logp[jnp.arange(N), targets]
    loss_ce = jnp.sum(w_t * nll) / jnp.sum(w_t)
    probs = jax.nn.softmax(logits, axis=1)
    pt = probs[jnp.arange(N), targets]
    loss_focal = -jnp.sum(w_t * (1.0 - pt) ** gamma * jnp.log(pt + 1e-8)) / N
    return alpha_ce * loss_ce + alpha_focal * loss_focal


if __name__ == "__main__":
    key = jax.random.PRNGKey(0)
    k1, k2 = jax.random.split(key)

    # Small but representative shapes: C a multiple of 128 (lane-dense),
    # N deliberately NOT a multiple of the tile so the ragged-tile path is exercised.
    N, C = 120, 256
    logits = jax.random.normal(k1, (N, C), dtype=jnp.float32)
    targets = jax.random.randint(k2, (N,), 0, C, dtype=jnp.int32)
    class_weights = 0.5 + 0.25 * (jnp.arange(C, dtype=jnp.float32) % 7)

    ref = _reference(logits, targets, class_weights)

    # 1) explicit small tile -> 4 grid steps, ragged last tile (24/32 valid rows).
    out = cross_entropy_focal_loss(logits, targets, class_weights,
                                   alpha_ce=1.0, alpha_focal=1.0, gamma=2.0,
                                   tile_rows=32)
    out = jax.block_until_ready(out)
    assert jnp.allclose(out, ref, rtol=1e-5, atol=1e-5), (out, ref)

    # 2) auto tile sizing (VMEM-budgeted, >= 2 grid steps).
    out2 = cross_entropy_focal_loss(logits, targets, class_weights)
    out2 = jax.block_until_ready(out2)
    assert jnp.allclose(out2, ref, rtol=1e-5, atol=1e-5), (out2, ref)

    # 3) bf16 logits: exercises 16-row sublane alignment and the in-kernel f32 upcast.
    logits_bf16 = logits.astype(jnp.bfloat16)
    ref_bf16 = _reference(logits_bf16, targets, class_weights)
    out3 = cross_entropy_focal_loss(logits_bf16, targets, class_weights)
    out3 = jax.block_until_ready(out3)
    assert jnp.allclose(out3, ref_bf16, rtol=1e-4, atol=1e-4), (out3, ref_bf16)

    print("KERNEL_OK")
</pallas_src>

<mosaic_0001>
module attributes {stable_mosaic.version = 11 : i64} {
  func.func @_ce_focal_partial_kernel(%arg0: i32, %arg1: memref<32x256xf32, #tpu.memory_space<vmem>>, %arg2: memref<32x1xi32, #tpu.memory_space<vmem>>, %arg3: memref<32x1xf32, #tpu.memory_space<vmem>>, %arg4: memref<1x8x128xf32, #tpu.memory_space<vmem>>) attributes {dimension_semantics = [#tpu.dimension_semantics<parallel>], iteration_bounds = array<i64: 4>, scalar_prefetch = 0 : i64, scratch_operands = 0 : i64, tpu.core_type = #tpu.core_type<tc>, window_params = [{transform_indices = @transform_0, window_bounds = array<i64: 32, 256>}, {transform_indices = @transform_1, window_bounds = array<i64: 32, 1>}, {transform_indices = @transform_2, window_bounds = array<i64: 32, 1>}, {transform_indices = @transform_3, window_bounds = array<i64: 1, 8, 128>}]} {
    %c0 = arith.constant 0 : index
    %c0_0 = arith.constant 0 : index
    %0 = vector.load %arg1[%c0, %c0_0] : memref<32x256xf32, #tpu.memory_space<vmem>>, vector<32x256xf32>
    %c0_1 = arith.constant 0 : index
    %c0_2 = arith.constant 0 : index
    %1 = vector.load %arg2[%c0_1, %c0_2] : memref<32x1xi32, #tpu.memory_space<vmem>>, vector<32x1xi32>
    %c0_3 = arith.constant 0 : index
    %c0_4 = arith.constant 0 : index
    %2 = vector.load %arg3[%c0_3, %c0_4] : memref<32x1xf32, #tpu.memory_space<vmem>>, vector<32x1xf32>
    %3 = tpu.iota {dimensions = array<i32: 0>} : vector<32x1xi32>
    %c32_i32 = arith.constant 32 : i32
    %4 = arith.muli %arg0, %c32_i32 : i32
    %5 = vector.broadcast %4 : i32 to vector<32x1xi32>
    %6 = arith.addi %3, %5 : vector<32x1xi32>
    %c120_i32 = arith.constant 120 : i32
    %7 = vector.broadcast %c120_i32 : i32 to vector<32x1xi32>
    %8 = arith.cmpi slt, %6, %7 : vector<32x1xi32>
    %9 = tpu.iota {dimensions = array<i32: 1>} : vector<32x256xi32>
    %10 = vector.broadcast %1 : vector<32x1xi32> to vector<32x256xi32>
    %11 = arith.cmpi eq, %9, %10 : vector<32x256xi32>
    %cst = arith.constant dense<0xFF800000> : vector<32xf32>
    %12 = vector.multi_reduction <maximumf>, %0, %cst [1] : vector<32x256xf32> to vector<32xf32>
    %13 = vector.shape_cast %12 : vector<32xf32> to vector<32x1xf32>
    %14 = vector.broadcast %13 : vector<32x1xf32> to vector<32x256xf32>
    %15 = arith.subf %0, %14 : vector<32x256xf32>
    %16 = math.exp %15 : vector<32x256xf32>
    %cst_5 = arith.constant 0.000000e+00 : f32
    %17 = vector.broadcast %cst_5 : f32 to vector<32x256xf32>
    %18 = arith.select %11, %0, %17 : vector<32x256xi1>, vector<32x256xf32>
    %cst_6 = arith.constant 1.000000e+00 : f32
    %19 = vector.broadcast %cst_6 : f32 to vector<256x128xf32>
    %cst_7 = arith.constant dense<0.000000e+00> : vector<32x128xf32>
    %20 = tpu.matmul %16, %19, %cst_7 {dimension_numbers = #tpu.dot_dimension_numbers<[1], [0], [0], [1], [0, 0, 1, 1], [], []>} : vector<32x256xf32>, vector<256x128xf32>, vector<32x128xf32> -> vector<32x128xf32>
    %cst_8 = arith.constant dense<0.000000e+00> : vector<32x128xf32>
    %21 = tpu.matmul %18, %19, %cst_8 {dimension_numbers = #tpu.dot_dimension_numbers<[1], [0], [0], [1], [0, 0, 1, 1], [], []>} : vector<32x256xf32>, vector<256x128xf32>, vector<32x128xf32> -> vector<32x128xf32>
    %22 = math.log %20 : vector<32x128xf32>
    %23 = vector.broadcast %13 : vector<32x1xf32> to vector<32x128xf32>
    %24 = arith.addf %22, %23 : vector<32x128xf32>
    %25 = arith.subf %24, %21 : vector<32x128xf32>
    %26 = arith.subf %21, %24 : vector<32x128xf32>
    %27 = math.exp %26 : vector<32x128xf32>
    %cst_9 = arith.constant 1.000000e+00 : f32
    %28 = vector.broadcast %cst_9 : f32 to vector<32x128xf32>
    %29 = arith.subf %28, %27 : vector<32x128xf32>
    %30 = arith.mulf %29, %29 : vector<32x128xf32>
    %31 = vector.broadcast %2 : vector<32x1xf32> to vector<32x128xf32>
    %32 = arith.mulf %31, %30 : vector<32x128xf32>
    %cst_10 = arith.constant 9.99999993E-9 : f32
    %33 = vector.broadcast %cst_10 : f32 to vector<32x128xf32>
    %34 = arith.addf %27, %33 : vector<32x128xf32>
    %35 = math.log %34 : vector<32x128xf32>
    %36 = arith.mulf %32, %35 : vector<32x128xf32>
    %37 = vector.broadcast %2 : vector<32x1xf32> to vector<32x128xf32>
    %38 = arith.mulf %37, %25 : vector<32x128xf32>
    %cst_11 = arith.constant 0.000000e+00 : f32
    %39 = vector.shape_cast %8 : vector<32x1xi1> to vector<32x1xi1>
    %40 = vector.broadcast %39 : vector<32x1xi1> to vector<32x128xi1>
    %41 = vector.broadcast %cst_11 : f32 to vector<32x128xf32>
    %42 = arith.select %40, %38, %41 : vector<32x128xi1>, vector<32x128xf32>
    %43 = vector.shape_cast %42 : vector<32x128xf32> to vector<1x32x128xf32>
    %cst_12 = arith.constant dense<0.000000e+00> : vector<1xf32>
    %44 = vector.multi_reduction <add>, %43, %cst_12 [1, 2] : vector<1x32x128xf32> to vector<1xf32>
    %45 = vector.shape_cast %44 : vector<1xf32> to vector<1x1x1xf32>
    %46 = vector.extract %45[0, 0, 0] : f32 from vector<1x1x1xf32>
    %cst_13 = arith.constant 1.280000e+02 : f32
    %47 = arith.divf %46, %cst_13 : f32
    %cst_14 = arith.constant 0.000000e+00 : f32
    %48 = vector.broadcast %cst_14 : f32 to vector<32x1xf32>
    %49 = arith.select %8, %2, %48 : vector<32x1xi1>, vector<32x1xf32>
    %50 = vector.shape_cast %49 : vector<32x1xf32> to vector<1x32x1xf32>
    %cst_15 = arith.constant dense<0.000000e+00> : vector<1xf32>
    %51 = vector.multi_reduction <add>, %50, %cst_15 [1, 2] : vector<1x32x1xf32> to vector<1xf32>
    %52 = vector.shape_cast %51 : vector<1xf32> to vector<1x1x1xf32>
    %53 = vector.extract %52[0, 0, 0] : f32 from vector<1x1x1xf32>
    %cst_16 = arith.constant 0.000000e+00 : f32
    %54 = vector.shape_cast %8 : vector<32x1xi1> to vector<32x1xi1>
    %55 = vector.broadcast %54 : vector<32x1xi1> to vector<32x128xi1>
    %56 = vector.broadcast %cst_16 : f32 to vector<32x128xf32>
    %57 = arith.select %55, %36, %56 : vector<32x128xi1>, vector<32x128xf32>
    %58 = vector.shape_cast %57 : vector<32x128xf32> to vector<1x32x128xf32>
    %cst_17 = arith.constant dense<0.000000e+00> : vector<1xf32>
    %59 = vector.multi_reduction <add>, %58, %cst_17 [1, 2] : vector<1x32x128xf32> to vector<1xf32>
    %60 = vector.shape_cast %59 : vector<1xf32> to vector<1x1x1xf32>
    %61 = vector.extract %60[0, 0, 0] : f32 from vector<1x1x1xf32>
    %cst_18 = arith.constant 1.280000e+02 : f32
    %62 = arith.divf %61, %cst_18 : f32
    %63 = tpu.iota {dimensions = array<i32: 2>} : vector<1x8x128xi32>
    %c0_i32 = arith.constant 0 : i32
    %64 = vector.broadcast %c0_i32 : i32 to vector<1x8x128xi32>
    %65 = arith.cmpi eq, %63, %64 : vector<1x8x128xi32>
    %c1_i32 = arith.constant 1 : i32
    %66 = vector.broadcast %c1_i32 : i32 to vector<1x8x128xi32>
    %67 = arith.cmpi eq, %63, %66 : vector<1x8x128xi32>
    %c2_i32 = arith.constant 2 : i32
    %68 = vector.broadcast %c2_i32 : i32 to vector<1x8x128xi32>
    %69 = arith.cmpi eq, %63, %68 : vector<1x8x128xi32>
    %cst_19 = arith.constant 0.000000e+00 : f32
    %70 = vector.broadcast %62 : f32 to vector<1x8x128xf32>
    %71 = vector.broadcast %cst_19 : f32 to vector<1x8x128xf32>
    %72 = arith.select %69, %70, %71 : vector<1x8x128xi1>, vector<1x8x128xf32>
    %73 = vector.broadcast %53 : f32 to vector<1x8x128xf32>
    %74 = arith.select %67, %73, %72 : vector<1x8x128xi1>, vector<1x8x128xf32>
    %75 = vector.broadcast %47 : f32 to vector<1x8x128xf32>
    %76 = arith.select %65, %75, %74 : vector<1x8x128xi1>, vector<1x8x128xf32>
    %c0_20 = arith.constant 0 : index
    %c0_21 = arith.constant 0 : index
    %c0_22 = arith.constant 0 : index
    %77 = vector.load %arg4[%c0_20, %c0_21, %c0_22] : memref<1x8x128xf32, #tpu.memory_space<vmem>>, vector<1x8x128xf32>
    tpu.vector_store %arg4[%c0_20, %c0_21, %c0_22], %76 {strides = array<i32>} : memref<1x8x128xf32, #tpu.memory_space<vmem>>, vector<1x8x128xf32>,
    return
  }
  func.func @transform_0(%arg0: i32) -> (i32, i32) {
    %c0_i32 = arith.constant 0 : i32
    %c0_i32_0 = arith.constant 0 : i32
    return %arg0, %c0_i32 : i32, i32
  }
  func.func @transform_1(%arg0: i32) -> (i32, i32) {
    %c0_i32 = arith.constant 0 : i32
    %c0_i32_0 = arith.constant 0 : i32
    return %arg0, %c0_i32 : i32, i32
  }
  func.func @transform_2(%arg0: i32) -> (i32, i32) {
    %c0_i32 = arith.constant 0 : i32
    %c0_i32_0 = arith.constant 0 : i32
    return %arg0, %c0_i32 : i32, i32
  }
  func.func @transform_3(%arg0: i32) -> (i32, i32, i32) {
    %c0_i32 = arith.constant 0 : i32
    %c0_i32_0 = arith.constant 0 : i32
    %c0_i32_1 = arith.constant 0 : i32
    return %arg0, %c0_i32, %c0_i32_0 : i32, i32, i32
  }
}

</mosaic_0001>

<llo_original>
// kernel: tpu_custom_call.1
$region0: #{tpu_custom_call.1}
  #allocation0 [shape = 'u32[]', space=smem, size = 0x4, offset = 0x4, fixed_abs, tag = 'smem constant byte address 0x4 - core index']
  #allocation1 [shape = 'u32[144,128]{1,0:T(1,128)}', space=vmem, size = 0x12000, scoped, tag = 'internal scratch']
  %s0 = inlined_call_operand.vmem [shape: f32[120,256], index: 0, kind: input, shape index: {}]
  %s1 = inlined_call_operand.vmem [shape: s32[120,1], index: 1, kind: input, shape index: {}]
  %s2 = inlined_call_operand.vmem [shape: f32[120,1], index: 2, kind: input, shape index: {}]
  %s3 = inlined_call_operand.hbm [shape: f32[4,8,128], index: 3, kind: output, shape index: {}]
  %s4 = sld [smem:[#allocation0]]
  $region45: #{tpu_custom_call.1} parent=0
    _
  %s6 = ssub.s32 1, %s4
  %s7 = scalar_select 0, %s6, %s4
  $region1: #{tpu_custom_call.1} parent=0
    #allocation2 [shape = 'u8[8192]{0}', space=vmem, size = 0x2000, scoped, tag = 'output window, operand 0']
    #allocation3 [shape = 's32[2]{0}', space=sflag, size = 0x8, scoped, tag = 'scoped memory for tpu_custom_call.1']
    %8 = vsyncpa [#allocation3], 0
    %s9 = scalar_lea.sflag [#allocation3], 1
    %10 = vsyncpa %s9, 0
    loop: start=0, step=1, limit=6
    $region2: #{tpu_custom_call.1} parent=1 // loop_pre_header
      _
    $region3: #{tpu_custom_call.1} parent=1 // loop_header
      %s12 = sphi 0, %s16
      %p13 = scmp.ge.s32.totalorder %s12, 6
      %s22 = sphi 0, %s24
      %s25 = sphi 0, %s22
      %s26 = sphi 0, %s25
      %s42 = sphi 0, %s26
      %s48 = sphi 0, %s50
      %s51 = sphi 0, %s48
      %s52 = sphi 0, %s51
      %s68 = sphi 0, %s52
      %s74 = sphi 0, %s76
      %s77 = sphi 0, %s74
      %s78 = sphi 0, %s77
      %s94 = sphi 0, %s78
      %s100 = sphi 0, %s102
      %s103 = sphi 0, %s100
      %s104 = sphi 0, %s103
      %s120 = sphi 0, %s104
    $region4: #{tpu_custom_call.1} parent=1 // loop_header_branch
      %15 = sbr.rel (%p13) target = $region8
    $region5: #{tpu_custom_call.1} parent=1 // loop_body
      %s17 = ssub.s32 %s12, 1
      %s18 = ssub.s32 %s12, 2
      %s19 = sadd.s32 %s12, 1
      %s20 = ssub.s32 %s12, %s19
      %p21 = scmp.eq.s32.totalorder %s20, 0
      %s23 = sadd.s32 %s22, 1
      %s24 = scalar_select %p21, %s22, %s23
      %p27 = pneg %p21
      %p28 = scmp.eq.s32.totalorder %s12, 3
      %p29 = por %p27, %p28
      %p30 = scmp.ne.s32.totalorder %s22, %s25
      %p31 = scmp.eq.s32.totalorder %s12, 0
      %p32 = por %p30, %p31
      %p33 = scmp.ne.s32.totalorder %s22, %s25
      %p34 = scmp.eq.s32.totalorder %s17, 3
      %p35 = por %p33, %p34
      %p36 = scmp.ne.s32.totalorder %s25, %s26
      %p37 = scmp.eq.s32.totalorder %s17, 0
      %p38 = por %p36, %p37
      %p39 = scmp.ne.s32.totalorder %s25, %s26
      %p40 = scmp.eq.s32.totalorder %s18, 3
      %p41 = por %p39, %p40
      %p43 = scmp.ne.s32.totalorder %s26, %s42
      %p44 = scmp.eq.s32.totalorder %s18, 0
      %p45 = por %p43, %p44
      %s46 = ssub.s32 %s12, %s19
      %p47 = scmp.eq.s32.totalorder %s46, 0
      %s49 = sadd.s32 %s48, 1
      %s50 = scalar_select %p47, %s48, %s49
      %p53 = pneg %p47
      %p54 = scmp.eq.s32.totalorder %s12, 3
      %p55 = por %p53, %p54
      %p56 = scmp.ne.s32.totalorder %s48, %s51
      %p57 = scmp.eq.s32.totalorder %s12, 0
      %p58 = por %p56, %p57
      %p59 = scmp.ne.s32.totalorder %s48, %s51
      %p60 = scmp.eq.s32.totalorder %s17, 3
      %p61 = por %p59, %p60
      %p62 = scmp.ne.s32.totalorder %s51, %s52
      %p63 = scmp.eq.s32.totalorder %s17, 0
      %p64 = por %p62, %p63
      %p65 = scmp.ne.s32.totalorder %s51, %s52
      %p66 = scmp.eq.s32.totalorder %s18, 3
      %p67 = por %p65, %p66
      %p69 = scmp.ne.s32.totalorder %s52, %s68
      %p70 = scmp.eq.s32.totalorder %s18, 0
      %p71 = por %p69, %p70
      %s72 = ssub.s32 %s12, %s19
      %p73 = scmp.eq.s32.totalorder %s72, 0
      %s75 = sadd.s32 %s74, 1
      %s76 = scalar_select %p73, %s74, %s75
      %p79 = pneg %p73
      %p80 = scmp.eq.s32.totalorder %s12, 3
      %p81 = por %p79, %p80
      %p82 = scmp.ne.s32.totalorder %s74, %s77
      %p83 = scmp.eq.s32.totalorder %s12, 0
      %p84 = por %p82, %p83
      %p85 = scmp.ne.s32.totalorder %s74, %s77
      %p86 = scmp.eq.s32.totalorder %s17, 3
      %p87 = por %p85, %p86
      %p88 = scmp.ne.s32.totalorder %s77, %s78
      %p89 = scmp.eq.s32.totalorder %s17, 0
      %p90 = por %p88, %p89
      %p91 = scmp.ne.s32.totalorder %s77, %s78
      %p92 = scmp.eq.s32.totalorder %s18, 3
      %p93 = por %p91, %p92
      %p95 = scmp.ne.s32.totalorder %s78, %s94
      %p96 = scmp.eq.s32.totalorder %s18, 0
      %p97 = por %p95, %p96
      %s98 = ssub.s32 %s12, %s19
      %p99 = scmp.eq.s32.totalorder %s98, 0
      %s101 = sadd.s32 %s100, 1
      %s102 = scalar_select %p99, %s100, %s101
      %p105 = pneg %p99
      %p106 = scmp.eq.s32.totalorder %s12, 3
      %p107 = por %p105, %p106
      %p108 = scmp.ne.s32.totalorder %s100, %s103
      %p109 = scmp.eq.s32.totalorder %s12, 0
      %p110 = por %p108, %p109
      %p111 = scmp.ne.s32.totalorder %s100, %s103
      %p112 = scmp.eq.s32.totalorder %s17, 3
      %p113 = por %p111, %p112
      %p114 = scmp.ne.s32.totalorder %s103, %s104
      %p115 = scmp.eq.s32.totalorder %s17, 0
      %p116 = por %p114, %p115
      %p117 = scmp.ne.s32.totalorder %s103, %s104
      %p118 = scmp.eq.s32.totalorder %s18, 3
      %p119 = por %p117, %p118
      %p121 = scmp.ne.s32.totalorder %s104, %s120
      %p122 = scmp.eq.s32.totalorder %s18, 0
      %p123 = por %p121, %p122
      %p124 = scmp.le.s32.totalorder 1, %s12
      %p125 = scmp.lt.s32.totalorder %s12, 5
      %p126 = pnand %p124, %p125
      %p127 = pneg %p126
      // Predicated region
      $region9: #{tpu_custom_call.1} parent=5 // pred_check
        _
      $region10: #{tpu_custom_call.1} parent=5 // pred_check_branch
        %129 = sbr.rel (%p126) target = $region12
      $region11: #{tpu_custom_call.1} parent=5 // pred_region
        %s130 = ssub.s32 %s12, 1
      $region12: #{tpu_custom_call.1} parent=5 // pred_fallthru
        _
      %p131 = scmp.lt.s32.totalorder %s12, 4
      // Predicated region
      $region13: #{tpu_custom_call.1} parent=5 // pred_check
        %p132 = pneg %p131
      $region14: #{tpu_custom_call.1} parent=5 // pred_check_branch
        %134 = sbr.rel (%p132) target = $region16
      $region15: #{tpu_custom_call.1} parent=5 // pred_region
        // Predicated region
        $region17: #{tpu_custom_call.1} parent=15 // pred_check
          %p135 = pneg %p32
        $region18: #{tpu_custom_call.1} parent=15 // pred_check_branch
          %137 = sbr.rel (%p135) target = $region20
        $region19: #{tpu_custom_call.1} parent=15 // pred_region
          %s138 = smul.u32 4, %s12
          %s139 = ssub.s32 15, %s138
          %p140 = scmp.lt.s32.totalorder %s139, 4
          %s141 = scalar_select %p140, %s139, 4
          %s142 = smul.u32 128, %s141
          %s143 = smul.u32 %s142, 2
          %p144 = scmp.lt.s32.totalorder %s138, 14
          %s145 = scalar_select %p144, %s138, 14
          %s146 = smul.addr %s145, 2
          %s147 = smul.addr %s146, 8
          %s148 = scalar_lea.vmem %s0, %s147
          %s149 = smul.u32 4, %s12
          %s150 = ssub.s32 15, %s149
          %p151 = scmp.lt.s32.totalorder %s150, 4
          %s152 = scalar_select %p151, %s150, 4
          %s153 = smul.u32 128, %s152
          %s154 = smul.u32 %s153, 2
        $region20: #{tpu_custom_call.1} parent=15 // pred_fallthru
          _
        // Predicated region
        $region21: #{tpu_custom_call.1} parent=15 // pred_check
          %p155 = pneg %p58
        $region22: #{tpu_custom_call.1} parent=15 // pred_check_branch
          %157 = sbr.rel (%p155) target = $region24
        $region23: #{tpu_custom_call.1} parent=15 // pred_region
          %s158 = smul.u32 4, %s12
          %s159 = ssub.s32 15, %s158
          %p160 = scmp.lt.s32.totalorder %s159, 4
          %s161 = scalar_select %p160, %s159, 4
          %s162 = smul.u32 128, %s161
          %p163 = scmp.lt.s32.totalorder %s158, 14
          %s164 = scalar_select %p163, %s158, 14
          %s165 = smul.addr %s164, 8
          %s166 = scalar_lea.vmem %s1, %s165
          %s167 = smul.u32 4, %s12
          %s168 = ssub.s32 15, %s167
          %p169 = scmp.lt.s32.totalorder %s168, 4
          %s170 = scalar_select %p169, %s168, 4
          %s171 = smul.u32 128, %s170
        $region24: #{tpu_custom_call.1} parent=15 // pred_fallthru
          _
        // Predicated region
        $region25: #{tpu_custom_call.1} parent=15 // pred_check
          %p172 = pneg %p84
        $region26: #{tpu_custom_call.1} parent=15 // pred_check_branch
          %174 = sbr.rel (%p172) target = $region28
        $region27: #{tpu_custom_call.1} parent=15 // pred_region
          %s175 = smul.u32 4, %s12
          %s176 = ssub.s32 15, %s175
          %p177 = scmp.lt.s32.totalorder %s176, 4
          %s178 = scalar_select %p177, %s176, 4
          %s179 = smul.u32 128, %s178
          %p180 = scmp.lt.s32.totalorder %s175, 14
          %s181 = scalar_select %p180, %s175, 14
          %s182 = smul.addr %s181, 8
          %s183 = scalar_lea.vmem %s2, %s182
          %s184 = smul.u32 4, %s12
          %s185 = ssub.s32 15, %s184
          %p186 = scmp.lt.s32.totalorder %s185, 4
          %s187 = scalar_select %p186, %s185, 4
          %s188 = smul.u32 128, %s187
        $region28: #{tpu_custom_call.1} parent=15 // pred_fallthru
          _
      $region16: #{tpu_custom_call.1} parent=5 // pred_fallthru
        _
      %p189 = scmp.le.s32.totalorder 1, %s12
      %p190 = scmp.lt.s32.totalorder %s12, 5
      %p191 = pnand %p189, %p190
      %p192 = pneg %p191
      // Predicated region
      $region29: #{tpu_custom_call.1} parent=5 // pred_check
        _
      $region30: #{tpu_custom_call.1} parent=5 // pred_check_branch
        %194 = sbr.rel (%p191) target = $region32
      $region31: #{tpu_custom_call.1} parent=5 // pred_region
        %s195 = ssub.s32 %s12, 1
        %s196 = smul.u32 4, %s17
        %s197 = ssub.s32 15, %s196
        %p198 = scmp.lt.s32.totalorder %s197, 4
        %s199 = scalar_select %p198, %s197, 4
        %s200 = smul.u32 128, %s199
        %s201 = smul.u32 %s200, 2
        %p202 = scmp.lt.s32.totalorder %s196, 14
        %s203 = scalar_select %p202, %s196, 14
        %s204 = smul.addr %s203, 2
        %s205 = smul.addr %s204, 8
        %s206 = scalar_lea.vmem %s0, %s205
        %p207 = pneg %p38
        %p208 = pneg %p35
        %s209 = smul.u32 4, %s17
        %s210 = ssub.s32 15, %s209
        %p211 = scmp.lt.s32.totalorder %s210, 4
        %s212 = scalar_select %p211, %s210, 4
        %s213 = smul.u32 128, %s212
        %p214 = scmp.lt.s32.totalorder %s209, 14
        %s215 = scalar_select %p214, %s209, 14
        %s216 = smul.addr %s215, 8
        %s217 = scalar_lea.vmem %s1, %s216
        %p218 = pneg %p64
        %p219 = pneg %p61
        %s220 = smul.u32 4, %s17
        %s221 = ssub.s32 15, %s220
        %p222 = scmp.lt.s32.totalorder %s221, 4
        %s223 = scalar_select %p222, %s221, 4
        %s224 = smul.u32 128, %s223
        %p225 = scmp.lt.s32.totalorder %s220, 14
        %s226 = scalar_select %p225, %s220, 14
        %s227 = smul.addr %s226, 8
        %s228 = scalar_lea.vmem %s2, %s227
        %p229 = pneg %p90
        %p230 = pneg %p87
        %p231 = pneg %p116
        %p232 = pneg %p113
        %s233 = sand.u32 %s103, 1
        %s234 = scalar_lea.sflag [#allocation3], %s233
        %s235 = sand.u32 %s103, 1
        %s236 = smul.addr %s235, 8
        %s237 = scalar_lea.vmem [#allocation2], %s236
        %s238 = smul.u32 4, %s17
        %s239 = ssub.s32 15, %s238
        %p240 = scmp.lt.s32.totalorder %s239, 4
        %s241 = scalar_select %p240, %s239, 4
        %s242 = smul.u32 128, %s241
        %s243 = smul.u32 %s242, 2
        %p244 = scmp.lt.s32.totalorder %s238, 14
        %s245 = scalar_select %p244, %s238, 14
        %s246 = smul.addr %s245, 2
        %s247 = smul.addr %s246, 8
        %s248 = scalar_lea.vmem %s0, %s247
        %s249 = smul.u32 4, %s17
        %s250 = ssub.s32 15, %s249
        %p251 = scmp.lt.s32.totalorder %s250, 4
        %s252 = scalar_select %p251, %s250, 4
        %s253 = smul.u32 128, %s252
        %s254 = smul.u32 %s253, 2
        %s255 = smul.u32 4, %s17
        %s256 = ssub.s32 15, %s255
        %p257 = scmp.lt.s32.totalorder %s256, 4
        %s258 = scalar_select %p257, %s256, 4
        %s259 = smul.u32 128, %s258
        %p260 = scmp.lt.s32.totalorder %s255, 14
        %s261 = scalar_select %p260, %s255, 14
        %s262 = smul.addr %s261, 8
        %s263 = scalar_lea.vmem %s1, %s262
        %s264 = smul.u32 4, %s17
        %s265 = ssub.s32 15, %s264
        %p266 = scmp.lt.s32.totalorder %s265, 4
        %s267 = scalar_select %p266, %s265, 4
        %s268 = smul.u32 128, %s267
        %s269 = smul.u32 4, %s17
        %s270 = ssub.s32 15, %s269
        %p271 = scmp.lt.s32.totalorder %s270, 4
        %s272 = scalar_select %p271, %s270, 4
        %s273 = smul.u32 128, %s272
        %p274 = scmp.lt.s32.totalorder %s269, 14
        %s275 = scalar_select %p274, %s269, 14
        %s276 = smul.addr %s275, 8
        %s277 = scalar_lea.vmem %s2, %s276
        %s278 = smul.u32 4, %s17
        %s279 = ssub.s32 15, %s278
        %p280 = scmp.lt.s32.totalorder %s279, 4
        %s281 = scalar_select %p280, %s279, 4
        %s282 = smul.u32 128, %s281
        %v283 = vld [vmem:[%s248] sm:$0xff]
        %v284 = vld [vmem:[%s248 + $0x8] sm:$0xff]
        %v285 = vld [vmem:[%s248 + $0x10] sm:$0xff]
        %v286 = vld [vmem:[%s248 + $0x18] sm:$0xff]
        %v287 = vld [vmem:[%s248 + $0x20] sm:$0xff]
        %v288 = vld [vmem:[%s248 + $0x28] sm:$0xff]
        %v289 = vld [vmem:[%s248 + $0x30] sm:$0xff]
        %v290 = vld [vmem:[%s248 + $0x38] sm:$0xff]
        %v291 = vld [vmem:[%s263] sm:$0xff]
        %v292 = vld [vmem:[%s263 + $0x8] sm:$0xff]
        %v293 = vld [vmem:[%s263 + $0x10] sm:$0xff]
        %v294 = vld [vmem:[%s263 + $0x18] sm:$0xff]
        %v295 = vld [vmem:[%s277] sm:$0xff]
        %v296 = vld [vmem:[%s277 + $0x8] sm:$0xff]
        %v297 = vld [vmem:[%s277 + $0x10] sm:$0xff]
        %v298 = vld [vmem:[%s277 + $0x18] sm:$0xff]
        %v299 = vlaneseq
        %v300 = vshrl.u32 %v299, 7
        %v301 = vadd.s32 %v300, 8
        %v302 = vadd.s32 %v300, 16
        %v303 = vadd.s32 %v300, 24
        %s304 = smul.u32 %s17, 32
        %v305 = vstv %s304
        %v306 = vadd.s32 %v300, %v305
        %v307 = vadd.s32 %v301, %v305
        %v308 = vadd.s32 %v302, %v305
        %v309 = vadd.s32 %v303, %v305
        %vm310 = vcmp.lt.s32.totalorder %v306, 120
        %vm311 = vcmp.lt.s32.totalorder %v307, 120
        %vm312 = vcmp.lt.s32.totalorder %v308, 120
        %vm313 = vcmp.lt.s32.totalorder %v309, 120
        %v314 = vlaneseq
        %v315 = vand.u32 %v314, 127
        %v316 = vadd.s32 %v315, 128
        %317 = vset.pattern.permute.xlu0 0
        %318 = vperm.xlu0 %317, %v291
        %v319 = vpop.permute.xlu0 %318
        %320 = vset.pattern.permute.xlu0 0
        %321 = vperm.xlu0 %320, %v292
        %v322 = vpop.permute.xlu0 %321
        %323 = vset.pattern.permute.xlu0 0
        %324 = vperm.xlu0 %323, %v293
        %v325 = vpop.permute.xlu0 %324
        %326 = vset.pattern.permute.xlu0 0
        %327 = vperm.xlu0 %326, %v294
        %v328 = vpop.permute.xlu0 %327
        %vm329 = vcmp.eq.s32.totalorder %v315, %v319
        %vm330 = vcmp.eq.s32.totalorder %v316, %v319
        %vm331 = vcmp.eq.s32.totalorder %v315, %v322
        %vm332 = vcmp.eq.s32.totalorder %v316, %v322
        %vm333 = vcmp.eq.s32.totalorder %v315, %v325
        %vm334 = vcmp.eq.s32.totalorder %v316, %v325
        %vm335 = vcmp.eq.s32.totalorder %v315, %v328
        %vm336 = vcmp.eq.s32.totalorder %v316, %v328
        %v337 = vmax.f32 %v283, %v284
        %338 = vmax.xlane.f32.xlu0 %v337
        %v339 = vpop.xlane.xlu0 %338
        %v340 = vmax.f32 %v285, %v286
        %341 = vmax.xlane.f32.xlu0 %v340
        %v342 = vpop.xlane.xlu0 %341
        %v343 = vmax.f32 %v287, %v288
        %344 = vmax.xlane.f32.xlu0 %v343
        %v345 = vpop.xlane.xlu0 %344
        %v346 = vmax.f32 %v289, %v290
        %347 = vmax.xlane.f32.xlu0 %v346
        %v348 = vpop.xlane.xlu0 %347
        %v349 = vsub.f32 %v283, %v339
        %v350 = vsub.f32 %v284, %v339
        %v351 = vsub.f32 %v285, %v342
        %v352 = vsub.f32 %v286, %v342
        %v353 = vsub.f32 %v287, %v345
        %v354 = vsub.f32 %v288, %v345
        %v355 = vsub.f32 %v289, %v348
        %v356 = vsub.f32 %v290, %v348
        %v357 = vmul.f32 %v349, 1.442695
        %v358 = vpow.pop %v357
        %v359 = vmul.f32 %v350, 1.442695
        %v360 = vpow.pop %v359
        %v361 = vmul.f32 %v351, 1.442695
        %v362 = vpow.pop %v361
        %v363 = vmul.f32 %v352, 1.442695
        %v364 = vpow.pop %v363
        %v365 = vmul.f32 %v353, 1.442695
        %v366 = vpow.pop %v365
        %v367 = vmul.f32 %v354, 1.442695
        %v368 = vpow.pop %v367
        %v369 = vmul.f32 %v355, 1.442695
        %v370 = vpow.pop %v369
        %v371 = vmul.f32 %v356, 1.442695
        %v372 = vpow.pop %v371
        %v373 = vsel %vm329, %v283, 0.0
        %v374 = vsel %vm330, %v284, 0.0
        %v375 = vsel %vm331, %v285, 0.0
        %v376 = vsel %vm332, %v286, 0.0
        %v377 = vsel %vm333, %v287, 0.0
        %v378 = vsel %vm334, %v288, 0.0
        %v379 = vsel %vm335, %v289, 0.0
        %v380 = vsel %vm336, %v290, 0.0
        %381 = vmatprep.subr.mxu0 0.0
        %382 = vmatpush1.msra.mxu0 1.0
        %383 = vmatprep.subr.mxu0 0.0
        %384 = vmatpush1.msra.mxu0 1.0
        %385 = vmatprep.subr.mxu0 0.0
        %386 = vmatpush1.msra.mxu0 1.0
        %387 = vmatprep.subr.mxu0 0.0
        %388 = vmatpush1.msra.mxu0 1.0
        %389 = vmatprep.subr.mxu0 0.0
        %390 = vmatpush1.msra.mxu0 1.0
        %391 = vmatprep.subr.mxu0 0.0
        %392 = vmatpush1.msra.mxu0 1.0
        %393 = vmatprep.subr.mxu0 0.0
        %394 = vmatpush1.msra.mxu0 1.0
        %395 = vmatprep.subr.mxu0 0.0
        %396 = vmatpush1.msra.mxu0 1.0
        %397 = vmatprep.subr.mxu0 0.0
        %398 = vmatpush1.msra.mxu0 1.0
        %399 = vmatprep.subr.mxu0 0.0
        %400 = vmatpush1.msra.mxu0 1.0
        %401 = vmatprep.subr.mxu0 0.0
        %402 = vmatpush1.msra.mxu0 1.0
        %403 = vmatprep.subr.mxu0 0.0
        %404 = vmatpush1.msra.mxu0 1.0
        %405 = vmatprep.subr.mxu0 0.0
        %406 = vmatpush1.msra.mxu0 1.0
        %407 = vmatprep.subr.mxu0 0.0
        %408 = vmatpush1.msra.mxu0 1.0
        %409 = vmatprep.subr.mxu0 0.0
        %410 = vmatpush1.msra.mxu0 1.0
        %411 = vmatprep.subr.mxu0 0.0
        %412 = vmatpush1.msra.mxu0 1.0
        %413 = vmatprep.subr.mxu0 0.0
        %414 = vmatpush1.msra.mxu0 1.0
        %415 = vmatprep.subr.mxu0 0.0
        %416 = vmatpush1.msra.mxu0 1.0
        %417 = vmatprep.subr.mxu0 0.0
        %418 = vmatpush1.msra.mxu0 1.0
        %419 = vmatprep.subr.mxu0 0.0
        %420 = vmatpush1.msra.mxu0 1.0
        %421 = vmatprep.subr.mxu0 0.0
        %422 = vmatpush1.msra.mxu0 1.0
        %423 = vmatprep.subr.mxu0 0.0
        %424 = vmatpush1.msra.mxu0 1.0
        %425 = vmatprep.subr.mxu0 0.0
        %426 = vmatpush1.msra.mxu0 1.0
        %427 = vmatprep.subr.mxu0 0.0
        %428 = vmatpush1.msra.mxu0 1.0
        %429 = vmatprep.subr.mxu0 0.0
        %430 = vmatpush1.msra.mxu0 1.0
        %431 = vmatprep.subr.mxu0 0.0
        %432 = vmatpush1.msra.mxu0 1.0
        %433 = vmatprep.subr.mxu0 0.0
        %434 = vmatpush1.msra.mxu0 1.0
        %435 = vmatprep.subr.mxu0 0.0
        %436 = vmatpush1.msra.mxu0 1.0
        %437 = vmatprep.subr.mxu0 0.0
        %438 = vmatpush1.msra.mxu0 1.0
        %439 = vmatprep.subr.mxu0 0.0
        %440 = vmatpush1.msra.mxu0 1.0
        %441 = vmatprep.subr.mxu0 0.0
        %442 = vmatpush1.msra.mxu0 1.0
        %443 = vmatprep.subr.mxu0 0.0
        %444 = vmatpush1.msra.mxu0 1.0
        %445 = vmatprep.mubr.f32.mxu0 %v360
        %446 = vmatmul.mubr.f32.gmra.mrb[0].mxu0 %v358
        %v447 = vpop.f32.mrb[0].mxu0
        %v448 = vadd.f32 0.0, %v447
        %v449 = vpop.f32.mrb[0].mxu0
        %450 = vmatprep.mubr.f32.mxu0 %v364
        %451 = vmatmul.mubr.f32.gmra.mrb[0].mxu0 %v362
        %v452 = vpop.f32.mrb[0].mxu0
        %v453 = vadd.f32 0.0, %v452
        %v454 = vpop.f32.mrb[0].mxu0
        %455 = vmatprep.mubr.f32.mxu0 %v368
        %456 = vmatmul.mubr.f32.gmra.mrb[0].mxu0 %v366
        %v457 = vpop.f32.mrb[0].mxu0
        %v458 = vadd.f32 0.0, %v457
        %v459 = vpop.f32.mrb[0].mxu0
        %460 = vmatprep.mubr.f32.mxu0 %v372
        %461 = vmatmul.mubr.f32.gmra.mrb[0].mxu0 %v370
        %v462 = vpop.f32.mrb[0].mxu0
        %v463 = vadd.f32 0.0, %v462
        %v464 = vpop.f32.mrb[0].mxu0
        %465 = vdwg.mxu0
        %466 = vmatprep.subr.mxu0 0.0
        %467 = vmatpush1.msra.mxu0 1.0
        %468 = vmatprep.subr.mxu0 0.0
        %469 = vmatpush1.msra.mxu0 1.0
        %470 = vmatprep.subr.mxu0 0.0
        %471 = vmatpush1.msra.mxu0 1.0
        %472 = vmatprep.subr.mxu0 0.0
        %473 = vmatpush1.msra.mxu0 1.0
        %474 = vmatprep.subr.mxu0 0.0
        %475 = vmatpush1.msra.mxu0 1.0
        %476 = vmatprep.subr.mxu0 0.0
        %477 = vmatpush1.msra.mxu0 1.0
        %478 = vmatprep.subr.mxu0 0.0
        %479 = vmatpush1.msra.mxu0 1.0
        %480 = vmatprep.subr.mxu0 0.0
        %481 = vmatpush1.msra.mxu0 1.0
        %482 = vmatprep.subr.mxu0 0.0
        %483 = vmatpush1.msra.mxu0 1.0
        %484 = vmatprep.subr.mxu0 0.0
        %485 = vmatpush1.msra.mxu0 1.0
        %486 = vmatprep.subr.mxu0 0.0
        %487 = vmatpush1.msra.mxu0 1.0
        %488 = vmatprep.subr.mxu0 0.0
        %489 = vmatpush1.msra.mxu0 1.0
        %490 = vmatprep.subr.mxu0 0.0
        %491 = vmatpush1.msra.mxu0 1.0
        %492 = vmatprep.subr.mxu0 0.0
        %493 = vmatpush1.msra.mxu0 1.0
        %494 = vmatprep.subr.mxu0 0.0
        %495 = vmatpush1.msra.mxu0 1.0
        %496 = vmatprep.subr.mxu0 0.0
        %497 = vmatpush1.msra.mxu0 1.0
        %498 = vmatprep.subr.mxu0 0.0
        %499 = vmatpush1.msra.mxu0 1.0
        %500 = vmatprep.subr.mxu0 0.0
        %501 = vmatpush1.msra.mxu0 1.0
        %502 = vmatprep.subr.mxu0 0.0
        %503 = vmatpush1.msra.mxu0 1.0
        %504 = vmatprep.subr.mxu0 0.0
        %505 = vmatpush1.msra.mxu0 1.0
        %506 = vmatprep.subr.mxu0 0.0
        %507 = vmatpush1.msra.mxu0 1.0
        %508 = vmatprep.subr.mxu0 0.0
        %509 = vmatpush1.msra.mxu0 1.0
        %510 = vmatprep.subr.mxu0 0.0
        %511 = vmatpush1.msra.mxu0 1.0
        %512 = vmatprep.subr.mxu0 0.0
        %513 = vmatpush1.msra.mxu0 1.0
        %514 = vmatprep.subr.mxu0 0.0
        %515 = vmatpush1.msra.mxu0 1.0
        %516 = vmatprep.subr.mxu0 0.0
        %517 = vmatpush1.msra.mxu0 1.0
        %518 = vmatprep.subr.mxu0 0.0
        %519 = vmatpush1.msra.mxu0 1.0
        %520 = vmatprep.subr.mxu0 0.0
        %521 = vmatpush1.msra.mxu0 1.0
        %522 = vmatprep.subr.mxu0 0.0
        %523 = vmatpush1.msra.mxu0 1.0
        %524 = vmatprep.subr.mxu0 0.0
        %525 = vmatpush1.msra.mxu0 1.0
        %526 = vmatprep.subr.mxu0 0.0
        %527 = vmatpush1.msra.mxu0 1.0
        %528 = vmatprep.subr.mxu0 0.0
        %529 = vmatpush1.msra.mxu0 1.0
        %530 = vmatprep.mubr.f32.mxu0 %v374
        %531 = vmatmul.mubr.f32.gmra.mrb[0].mxu0 %v373
        %v532 = vpop.f32.mrb[0].mxu0
        %v533 = vadd.f32 0.0, %v532
        %v534 = vpop.f32.mrb[0].mxu0
        %535 = vmatprep.mubr.f32.mxu0 %v376
        %536 = vmatmul.mubr.f32.gmra.mrb[0].mxu0 %v375
        %v537 = vpop.f32.mrb[0].mxu0
        %v538 = vadd.f32 0.0, %v537
        %v539 = vpop.f32.mrb[0].mxu0
        %540 = vmatprep.mubr.f32.mxu0 %v378
        %541 = vmatmul.mubr.f32.gmra.mrb[0].mxu0 %v377
        %v542 = vpop.f32.mrb[0].mxu0
        %v543 = vadd.f32 0.0, %v542
        %v544 = vpop.f32.mrb[0].mxu0
        %545 = vmatprep.mubr.f32.mxu0 %v380
        %546 = vmatmul.mubr.f32.gmra.mrb[0].mxu0 %v379
        %v547 = vpop.f32.mrb[0].mxu0
        %v548 = vadd.f32 0.0, %v547
        %v549 = vpop.f32.mrb[0].mxu0
        %550 = vdwg.mxu0
        %v551 = vlog2.pop %v448
        %v552 = vmul.f32 %v551, 0.6931472
        %v553 = vlog2.pop %v453
        %v554 = vmul.f32 %v553, 0.6931472
        %v555 = vlog2.pop %v458
        %v556 = vmul.f32 %v555, 0.6931472
        %v557 = vlog2.pop %v463
        %v558 = vmul.f32 %v557, 0.6931472
        %v559 = vadd.f32 %v552, %v339
        %v560 = vadd.f32 %v554, %v342
        %v561 = vadd.f32 %v556, %v345
        %v562 = vadd.f32 %v558, %v348
        %v563 = vsub.f32 %v559, %v533
        %v564 = vsub.f32 %v560, %v538
        %v565 = vsub.f32 %v561, %v543
        %v566 = vsub.f32 %v562, %v548
        %v567 = vsub.f32 %v533, %v559
        %v568 = vsub.f32 %v538, %v560
        %v569 = vsub.f32 %v543, %v561
        %v570 = vsub.f32 %v548, %v562
        %v571 = vmul.f32 %v567, 1.442695
        %v572 = vpow.pop %v571
        %v573 = vmul.f32 %v568, 1.442695
        %v574 = vpow.pop %v573
        %v575 = vmul.f32 %v569, 1.442695
        %v576 = vpow.pop %v575
        %v577 = vmul.f32 %v570, 1.442695
        %v578 = vpow.pop %v577
        %v579 = vsub.f32 1.0, %v572
        %v580 = vsub.f32 1.0, %v574
        %v581 = vsub.f32 1.0, %v576
        %v582 = vsub.f32 1.0, %v578
        %v583 = vmul.f32 %v579, %v579
        %v584 = vmul.f32 %v580, %v580
        %v585 = vmul.f32 %v581, %v581
        %v586 = vmul.f32 %v582, %v582
        %588 = vset.pattern.permute.xlu0 0
        %589 = vperm.xlu0 %588, %v295
        %v590 = vpop.permute.xlu0 %589
        %593 = vset.pattern.permute.xlu0 0
        %594 = vperm.xlu0 %593, %v296
        %v595 = vpop.permute.xlu0 %594
        %598 = vset.pattern.permute.xlu0 0
        %599 = vperm.xlu0 %598, %v297
        %v600 = vpop.permute.xlu0 %599
        %603 = vset.pattern.permute.xlu0 0
        %604 = vperm.xlu0 %603, %v298
        %v605 = vpop.permute.xlu0 %604
        %v607 = vmul.f32 %v590, %v583
        %v608 = vmul.f32 %v595, %v584
        %v609 = vmul.f32 %v600, %v585
        %v610 = vmul.f32 %v605, %v586
        %v611 = vadd.f32 %v572, 1e-08
        %v612 = vadd.f32 %v574, 1e-08
        %v613 = vadd.f32 %v576, 1e-08
        %v614 = vadd.f32 %v578, 1e-08
        %v615 = vlog2.pop %v611
        %v616 = vmul.f32 %v615, 0.6931472
        %v617 = vlog2.pop %v612
        %v618 = vmul.f32 %v617, 0.6931472
        %v619 = vlog2.pop %v613
        %v620 = vmul.f32 %v619, 0.6931472
        %v621 = vlog2.pop %v614
        %v622 = vmul.f32 %v621, 0.6931472
        %v623 = vmul.f32 %v607, %v616
        %v624 = vmul.f32 %v608, %v618
        %v625 = vmul.f32 %v609, %v620
        %v626 = vmul.f32 %v610, %v622
        %v627 = vmul.f32 %v590, %v563
        %v628 = vmul.f32 %v595, %v564
        %v629 = vmul.f32 %v600, %v565
        %v630 = vmul.f32 %v605, %v566
        %v631 = vsel %vm310, 1, 0
        %v632 = vsel %vm311, 1, 0
        %v633 = vsel %vm312, 1, 0
        %v634 = vsel %vm313, 1, 0
        %vm635 = vcmp.eq.s32.totalorder %v631, 1
        %vm636 = vcmp.eq.s32.totalorder %v632, 1
        %vm637 = vcmp.eq.s32.totalorder %v633, 1
        %vm638 = vcmp.eq.s32.totalorder %v634, 1
        %v639 = vsel %vm635, %v627, 0.0
        %v640 = vsel %vm636, %v628, 0.0
        %v641 = vsel %vm637, %v629, 0.0
        %v642 = vsel %vm638, %v630, 0.0
        %v643 = vadd.f32 %v639, %v640
        %v644 = vadd.f32 %v643, %v641
        %v645 = vadd.f32 %v644, %v642
        %646 = vadd.xlane.f32.xlu0 %v645
        %v647 = vpop.xlane.xlu0 %646
        %v648 = vrot.slane %v647, 4
        %v649 = vadd.f32 %v647, %v648
        %v650 = vrot.slane %v649, 2
        %v651 = vadd.f32 %v649, %v650
        %v652 = vrot.slane %v651, 1
        %v653 = vadd.f32 %v651, %v652
        %s654 = vtos %v653
        %v655 = vrcp.pop 128.0
        %s656 = vtos %v655
        %s657 = smul.f32 %s654, %s656
        %v658 = vsel %vm310, %v295, 0.0
        %v659 = vsel %vm311, %v296, 0.0
        %v660 = vsel %vm312, %v297, 0.0
        %v661 = vsel %vm313, %v298, 0.0
        %vm662 = vcmask 7168
        %v663 = vsel %vm662, %v658, 0.0
        %v664 = vsel %vm662, %v659, 0.0
        %v665 = vadd.f32 %v663, %v664
        %v666 = vsel %vm662, %v660, 0.0
        %v667 = vadd.f32 %v665, %v666
        %v668 = vsel %vm662, %v661, 0.0
        %v669 = vadd.f32 %v667, %v668
        %670 = vadd.xlane.f32.xlu0 %v669
        %v671 = vpop.xlane.xlu0 %670
        %v672 = vrot.slane %v671, 4
        %v673 = vadd.f32 %v671, %v672
        %v674 = vrot.slane %v673, 2
        %v675 = vadd.f32 %v673, %v674
        %v676 = vrot.slane %v675, 1
        %v677 = vadd.f32 %v675, %v676
        %s678 = vtos %v677
        %v679 = vsel %vm635, %v623, 0.0
        %v680 = vsel %vm636, %v624, 0.0
        %v681 = vsel %vm637, %v625, 0.0
        %v682 = vsel %vm638, %v626, 0.0
        %v683 = vadd.f32 %v679, %v680
        %v684 = vadd.f32 %v683, %v681
        %v685 = vadd.f32 %v684, %v682
        %686 = vadd.xlane.f32.xlu0 %v685
        %v687 = vpop.xlane.xlu0 %686
        %v688 = vrot.slane %v687, 4
        %v689 = vadd.f32 %v687, %v688
        %v690 = vrot.slane %v689, 2
        %v691 = vadd.f32 %v689, %v690
        %v692 = vrot.slane %v691, 1
        %v693 = vadd.f32 %v691, %v692
        %s694 = vtos %v693
        %v695 = vrcp.pop 128.0
        %s696 = vtos %v695
        %s697 = smul.f32 %s694, %s696
        %vm698 = vcmp.eq.s32.totalorder %v315, 0
        %vm699 = vcmp.eq.s32.totalorder %v315, 1
        %vm700 = vcmp.eq.s32.totalorder %v315, 2
        %v701 = vstv %s697
        %v702 = vsel %vm700, %v701, 0.0
        %v703 = vstv %s678
        %v704 = vsel %vm699, %v703, %v702
        %v705 = vstv %s657
        %v706 = vsel %vm698, %v705, %v704
        %707 = vst [vmem:[%s237] sm:$0xff] %v706
        %s708 = sand.u32 %s103, 1
        %s709 = scalar_lea.sflag [#allocation3], %s708
        %s710 = sand.u32 %s103, 1
        %s711 = smul.addr %s710, 8
        %s712 = scalar_lea.vmem [#allocation2], %s711
        // Predicated region
        $region33: #{tpu_custom_call.1} parent=31 // pred_check
          %p713 = pneg %p113
        $region34: #{tpu_custom_call.1} parent=31 // pred_check_branch
          %715 = sbr.rel (%p713) target = $region36
        $region35: #{tpu_custom_call.1} parent=31 // pred_region
          %s717 = ssub.s32 128, 128
          %718 = vsyncadd %s709, %s717
          %s719 = smul.addr %s17, 128
          %s720 = scalar_lea.hbm %s3, %s719
          %s722 = sshll.u32 %s712, 4
          %s723 = int_to_ptr.vmem [resolvable:$true] %s722
          %725 = dma.vmem_to_hbm [thread:$0]  %s723, 128, %s720, %s709
        $region36: #{tpu_custom_call.1} parent=31 // pred_fallthru
          _
      $region32: #{tpu_custom_call.1} parent=5 // pred_fallthru
        _
      %p726 = scmp.le.s32.totalorder 2, %s12
      // Predicated region
      $region37: #{tpu_custom_call.1} parent=5 // pred_check
        %p727 = pneg %p726
      $region38: #{tpu_custom_call.1} parent=5 // pred_check_branch
        %729 = sbr.rel (%p727) target = $region40
      $region39: #{tpu_custom_call.1} parent=5 // pred_region
        %s730 = ssub.s32 %s12, 2
        // Predicated region
        $region41: #{tpu_custom_call.1} parent=39 // pred_check
          %p731 = pneg %p119
        $region42: #{tpu_custom_call.1} parent=39 // pred_check_branch
          %733 = sbr.rel (%p731) target = $region44
        $region43: #{tpu_custom_call.1} parent=39 // pred_region
          %s734 = sand.u32 %s104, 1
          %s735 = scalar_lea.sflag [#allocation3], %s734
          %s736 = sand.u32 %s104, 1
          %s737 = smul.addr %s736, 8
          %s738 = scalar_lea.vmem [#allocation2], %s737
          %739 = dma.done %s735, 128
        $region44: #{tpu_custom_call.1} parent=39 // pred_fallthru
          _
      $region40: #{tpu_custom_call.1} parent=5 // pred_fallthru
        _
    $region6: #{tpu_custom_call.1} parent=1 // loop_footer
      %s16 = sadd.s32 1, %s12
    $region7: #{tpu_custom_call.1} parent=1 // loop_footer_branch
      %11 = sbr.rel target = $region3
    $region8: #{tpu_custom_call.1} parent=1 // loop_exit
      _
    %740 = vsyncpa [#allocation3], 1
    %s741 = scalar_lea.sflag [#allocation3], 1
    %742 = vsyncpa %s741, 1

</llo_original>
